<compile_context>
chip_gen: v6e
topology: v6e:2x2x1
jax: 0.10.0
libtpu: 0.0.40
codegen_flags: <defaults>
</compile_context>

<pallas_src>
import functools

import jax
import jax.numpy as jnp
from jax.experimental import pallas as pl
from jax.experimental.pallas import tpu as pltpu


# ----------------------------- kernel body -----------------------------------

def atse_kernel(x_ref, w1t_ref, b1_ref, w2t_ref, b2_ref,
                w3t_ref, b3_ref, w4t_ref, b4_ref, o_ref,
                *, inv_hw, inv_c):
    x = x_ref[...].astype(jnp.float32)                       # (Bt, C, HW)

    # ---- channel squeeze-excite: avg pool -> fc -> h_sigmoid (batched over Bt) ----
    y = jnp.sum(x, axis=2) * inv_hw                          # (Bt, C)   avg pool
    h1 = jnp.dot(y, w1t_ref[...],
                 preferred_element_type=jnp.float32) + b1_ref[...]   # (Bt, Cr)
    h1 = jnp.maximum(h1, 0.0)                                # ReLU
    y2 = jnp.dot(h1, w2t_ref[...],
                 preferred_element_type=jnp.float32) + b2_ref[...]   # (Bt, C)
    y2 = jnp.clip(y2 + 3.0, 0.0, 6.0) * (1.0 / 6.0)          # h_sigmoid

    # ---- spatial attention: channel mean -> fc1 -> h_tanh (batched over Bt) ----
    z = jnp.sum(x, axis=1) * inv_c                           # (Bt, HW) channel mean
    z1 = jnp.dot(z, w3t_ref[...],
                 preferred_element_type=jnp.float32) + b3_ref[...]   # (Bt, HWr)
    z1 = jnp.maximum(z1, 0.0)                                # ReLU
    z2 = jnp.dot(z1, w4t_ref[...],
                 preferred_element_type=jnp.float32) + b4_ref[...]   # (Bt, HW)
    z2 = jnp.clip(z2 + 3.0, 0.0, 6.0) * (1.0 / 6.0) - 0.5    # h_tanh

    # ---- combine: x * y * (1 + z), associated as (x*(1+z))*y so the only
    # full-size temporary is consumed immediately by the output store. ----
    out = (x * (1.0 + z2)[:, None, :]) * y2[:, :, None]
    o_ref[...] = out.astype(o_ref.dtype)


# ----------------------------- wrapper ----------------------------------------

def _vmem_capacity_bytes():
    try:
        return int(pltpu.get_tpu_info().vmem_capacity_bytes)
    except Exception:
        return 64 * 1024 * 1024          # conservative (v7x-sized) fallback


def _atse_jax(x, p):
    """Plain-XLA fallback (identical math); used when resident weights won't fit VMEM."""
    B, C, H, W = x.shape
    xf = x.astype(jnp.float32)
    y = jnp.mean(xf, axis=(2, 3))
    y = jnp.maximum(y @ p["w1"].T + p["b1"], 0.0)
    y = y @ p["w2"].T + p["b2"]
    y = (jnp.clip(y + 3.0, 0.0, 6.0) / 6.0).reshape(B, C, 1, 1)
    z = jnp.mean(xf, axis=1).reshape(B, H * W)
    z = jnp.maximum(z @ p["w3"].T + p["b3"], 0.0)
    z = z @ p["w4"].T + p["b4"]
    z = (jnp.clip(z + 3.0, 0.0, 6.0) / 6.0 - 0.5).reshape(B, 1, H, W)
    return (xf * y * (1.0 + z)).astype(x.dtype)


def atse_layer(x_nchw, params):
    """x_nchw: (B, C, H, W) float32/bfloat16. params: dict of weights (see init_params)."""
    B, C, H, W = x_nchw.shape
    HW = H * W

    w1, b1, w2, b2, w3, b3, w4, b4 = (params[k] for k in
        ("w1", "b1", "w2", "b2", "w3", "b3", "w4", "b4"))
    Cr = w1.shape[0]
    HWr = w3.shape[0]

    # Pre-transposed, row-vector f32 parameters: the kernel never transposes and
    # every matmul result is lane-dense.
    f32 = jnp.float32
    w1t = w1.T.astype(f32)                    # (C,  Cr)
    b1r = b1.reshape(1, Cr).astype(f32)
    w2t = w2.T.astype(f32)                    # (Cr, C)
    b2r = b2.reshape(1, C).astype(f32)
    w3t = w3.T.astype(f32)                    # (HW, HWr)
    b3r = b3.reshape(1, HWr).astype(f32)
    w4t = w4.T.astype(f32)                    # (HWr, HW)
    b4r = b4.reshape(1, HW).astype(f32)

    # ---- generation-aware sizing --------------------------------------------
    vmem_cap = _vmem_capacity_bytes()
    big_vmem = vmem_cap >= 100 * 1024 * 1024          # v5e/v6e (128 MiB) vs v7x (64 MiB)
    vmem_budget = (vmem_cap * 3) // 4                 # ~96 MiB v5e/v6e, ~48 MiB v7x
    block_bytes_target = (8 if big_vmem else 4) * 1024 * 1024
    min_steps = 2 if big_vmem else 4                  # v7x: keep both TensorCores fed
    headroom = 4 * 1024 * 1024

    per_b = C * HW * 4                                # f32 working bytes per batch elem
    weight_bytes = 4 * int(w1t.size + w2t.size + w3t.size + w4t.size
                           + b1r.size + b2r.size + b3r.size + b4r.size)

    if weight_bytes + 7 * per_b + headroom > vmem_budget:
        # TODO(synk): stream w3t/w4t from HBM (memory_space=pl.ANY + emit_pipeline
        # K/N-tiling of the spatial MLP) for very large resolutions instead of
        # falling back to XLA.
        return _atse_jax(x_nchw, params)

    # Bt = batch elements per grid step: large enough to amortize the ~0.35us
    # per-step overhead with multi-MiB DMAs, small enough to fit double-buffered
    # x/out tiles + temps (7 working tiles / elem) + single-buffered weights in
    # the per-generation VMEM budget, and capped so the grid has >= min_steps
    # steps (DMA pipelining / megacore sharding).
    bt_target = max(1, block_bytes_target // per_b)
    bt_budget = max(1, (vmem_budget - headroom - weight_bytes) // (7 * per_b))
    Bt = int(min(B, bt_target, bt_budget, pl.cdiv(B, min_steps)))
    Bt = max(1, Bt)

    grid = (pl.cdiv(B, Bt),)                          # last block may be partial (masked)

    x = x_nchw.reshape(B, C, HW)                      # row-major flatten: no data movement

    def inv_spec(shape):
        # Grid-invariant parameter: constant index_map + single buffering.
        return pl.BlockSpec(shape, lambda i: (0,) * len(shape),
                            pipeline_mode=pl.Buffered(1))

    kernel = functools.partial(atse_kernel, inv_hw=1.0 / HW, inv_c=1.0 / C)

    itemsize = x.dtype.itemsize
    cost = pl.CostEstimate(
        flops=int(B * (5 * C * HW + 4 * C * Cr + 4 * HW * HWr)),
        transcendentals=0,
        bytes_accessed=int(2 * B * C * HW * itemsize + weight_bytes))

    out = pl.pallas_call(
        kernel,
        out_shape=jax.ShapeDtypeStruct((B, C, HW), x.dtype),
        grid=grid,
        in_specs=[
            pl.BlockSpec((Bt, C, HW), lambda i: (i, 0, 0)),   # x
            inv_spec(w1t.shape), inv_spec(b1r.shape),
            inv_spec(w2t.shape), inv_spec(b2r.shape),
            inv_spec(w3t.shape), inv_spec(b3r.shape),
            inv_spec(w4t.shape), inv_spec(b4r.shape),
        ],
        out_specs=pl.BlockSpec((Bt, C, HW), lambda i: (i, 0, 0)),
        input_output_aliases={0: 0},                  # out reuses x's HBM buffer
        compiler_params=pltpu.CompilerParams(
            dimension_semantics=("parallel",),
            vmem_limit_bytes=int(vmem_budget)),
        cost_estimate=cost,
    )(x, w1t, b1r, w2t, b2r, w3t, b3r, w4t, b4r)

    return out.reshape(B, C, H, W)


# ----------------------------- test harness ------------------------------------

def init_params(key, channel, resolution, reduction=4):
    c, cr = channel, channel // reduction
    hw, hwr = resolution * resolution, (resolution * resolution) // reduction
    ks = jax.random.split(key, 8)
    scale = 0.1
    return {
        # fc: Linear(c, c//r), Linear(c//r, c)   (PyTorch weight shape: (out, in))
        "w1": scale * jax.random.normal(ks[0], (cr, c), jnp.float32),
        "b1": scale * jax.random.normal(ks[1], (cr,), jnp.float32),
        "w2": scale * jax.random.normal(ks[2], (c, cr), jnp.float32),
        "b2": scale * jax.random.normal(ks[3], (c,), jnp.float32),
        # fc1: Linear(hw, hw//r), Linear(hw//r, hw)
        "w3": scale * jax.random.normal(ks[4], (hwr, hw), jnp.float32),
        "b3": scale * jax.random.normal(ks[5], (hwr,), jnp.float32),
        "w4": scale * jax.random.normal(ks[6], (hw, hwr), jnp.float32),
        "b4": scale * jax.random.normal(ks[7], (hw,), jnp.float32),
    }


def atse_reference(x, p):
    """Pure-JAX reference mirroring the PyTorch forward (f32)."""
    B, C, H, W = x.shape
    y = jnp.mean(x, axis=(2, 3))                                   # (B, C)
    y = jnp.maximum(y @ p["w1"].T + p["b1"], 0.0)
    y = y @ p["w2"].T + p["b2"]
    y = jnp.clip(y + 3.0, 0.0, 6.0) / 6.0                          # h_sigmoid
    y = y.reshape(B, C, 1, 1)
    z = jnp.mean(x, axis=1).reshape(B, H * W)                      # (B, HW)
    z = jnp.maximum(z @ p["w3"].T + p["b3"], 0.0)
    z = z @ p["w4"].T + p["b4"]
    z = jnp.clip(z + 3.0, 0.0, 6.0) / 6.0 - 0.5                    # h_tanh
    z = z.reshape(B, 1, H, W)
    return x * y * (1 + z)


if __name__ == "__main__":
    key = jax.random.PRNGKey(0)

    # Case 1: HW a multiple of 128 (RES=16 -> HW=256); small B so every grid
    # step carries one batch element (exercises multi-step pipelining).
    B, C, RES = 2, 8, 16
    kx, kp, key = jax.random.split(key, 3)
    x = jax.random.normal(kx, (B, C, RES, RES), jnp.float32)
    params = init_params(kp, C, RES, reduction=4)
    out = jax.block_until_ready(atse_layer(x, params))
    ref = atse_reference(x, params)
    assert out.shape == ref.shape
    assert jnp.allclose(out, ref, atol=1e-5, rtol=1e-5), "mismatch vs reference (RES=16)"

    # Case 2: HW not a multiple of 128 (RES=12 -> HW=144, unpadded lane tail)
    # and B=7 so the last batch block of the cdiv grid is partial (masked).
    B2, C2, RES2 = 7, 8, 12
    kx2, kp2, key = jax.random.split(key, 3)
    x2 = jax.random.normal(kx2, (B2, C2, RES2, RES2), jnp.float32)
    params2 = init_params(kp2, C2, RES2, reduction=4)
    out2 = jax.block_until_ready(atse_layer(x2, params2))
    ref2 = atse_reference(x2, params2)
    assert out2.shape == ref2.shape
    assert jnp.allclose(out2, ref2, atol=1e-5, rtol=1e-5), "mismatch vs reference (RES=12)"

    # Case 3: bf16 activations pass-through (f32 compute in-kernel, bf16 I/O).
    B3, C3, RES3 = 3, 8, 16
    kx3, kp3 = jax.random.split(key)
    x3 = jax.random.normal(kx3, (B3, C3, RES3, RES3), jnp.float32).astype(jnp.bfloat16)
    params3 = init_params(kp3, C3, RES3, reduction=4)
    out3 = jax.block_until_ready(atse_layer(x3, params3))
    ref3 = atse_reference(x3.astype(jnp.float32), params3)
    assert out3.shape == ref3.shape
    assert out3.dtype == jnp.bfloat16
    assert jnp.allclose(out3.astype(jnp.float32), ref3, atol=5e-2, rtol=5e-2), \
        "mismatch vs reference (bf16)"

    print("KERNEL_OK")
</pallas_src>

<mosaic_0001>
module attributes {stable_mosaic.version = 11 : i64} {
  func.func @atse_kernel(%arg0: i32, %arg1: memref<1x8x256xf32, #tpu.memory_space<vmem>>, %arg2: memref<8x2xf32, #tpu.memory_space<vmem>>, %arg3: memref<1x2xf32, #tpu.memory_space<vmem>>, %arg4: memref<2x8xf32, #tpu.memory_space<vmem>>, %arg5: memref<1x8xf32, #tpu.memory_space<vmem>>, %arg6: memref<256x64xf32, #tpu.memory_space<vmem>>, %arg7: memref<1x64xf32, #tpu.memory_space<vmem>>, %arg8: memref<64x256xf32, #tpu.memory_space<vmem>>, %arg9: memref<1x256xf32, #tpu.memory_space<vmem>>, %arg10: memref<1x8x256xf32, #tpu.memory_space<vmem>>) attributes {dimension_semantics = [#tpu.dimension_semantics<parallel>], iteration_bounds = array<i64: 2>, scalar_prefetch = 0 : i64, scratch_operands = 0 : i64, tpu.core_type = #tpu.core_type<tc>, window_params = [{transform_indices = @transform_0, window_bounds = array<i64: 1, 8, 256>}, {pipeline_mode = #tpu.pipeline_mode<synchronous>, transform_indices = @transform_1, window_bounds = array<i64: 8, 2>}, {pipeline_mode = #tpu.pipeline_mode<synchronous>, transform_indices = @transform_2, window_bounds = array<i64: 1, 2>}, {pipeline_mode = #tpu.pipeline_mode<synchronous>, transform_indices = @transform_3, window_bounds = array<i64: 2, 8>}, {pipeline_mode = #tpu.pipeline_mode<synchronous>, transform_indices = @transform_4, window_bounds = array<i64: 1, 8>}, {pipeline_mode = #tpu.pipeline_mode<synchronous>, transform_indices = @transform_5, window_bounds = array<i64: 256, 64>}, {pipeline_mode = #tpu.pipeline_mode<synchronous>, transform_indices = @transform_6, window_bounds = array<i64: 1, 64>}, {pipeline_mode = #tpu.pipeline_mode<synchronous>, transform_indices = @transform_7, window_bounds = array<i64: 64, 256>}, {pipeline_mode = #tpu.pipeline_mode<synchronous>, transform_indices = @transform_8, window_bounds = array<i64: 1, 256>}, {transform_indices = @transform_9, window_bounds = array<i64: 1, 8, 256>}]} {
    %c0 = arith.constant 0 : index
    %c0_0 = arith.constant 0 : index
    %c0_1 = arith.constant 0 : index
    %0 = vector.load %arg1[%c0, %c0_0, %c0_1] : memref<1x8x256xf32, #tpu.memory_space<vmem>>, vector<1x8x256xf32>
    %cst = arith.constant dense<0.000000e+00> : vector<1x8xf32>
    %1 = vector.multi_reduction <add>, %0, %cst [2] : vector<1x8x256xf32> to vector<1x8xf32>
    %cst_2 = arith.constant 3.906250e-03 : f32
    %2 = vector.broadcast %cst_2 : f32 to vector<1x8xf32>
    %3 = arith.mulf %1, %2 : vector<1x8xf32>
    %c0_3 = arith.constant 0 : index
    %c0_4 = arith.constant 0 : index
    %4 = vector.load %arg2[%c0_3, %c0_4] : memref<8x2xf32, #tpu.memory_space<vmem>>, vector<8x2xf32>
    %cst_5 = arith.constant dense<0.000000e+00> : vector<1x2xf32>
    %5 = tpu.matmul %3, %4, %cst_5 {dimension_numbers = #tpu.dot_dimension_numbers<[1], [0], [0], [1], [0, 0, 1, 1], [], []>} : vector<1x8xf32>, vector<8x2xf32>, vector<1x2xf32> -> vector<1x2xf32>
    %c0_6 = arith.constant 0 : index
    %c0_7 = arith.constant 0 : index
    %6 = vector.load %arg3[%c0_6, %c0_7] : memref<1x2xf32, #tpu.memory_space<vmem>>, vector<1x2xf32>
    %7 = arith.addf %5, %6 : vector<1x2xf32>
    %cst_8 = arith.constant 0.000000e+00 : f32
    %8 = vector.broadcast %cst_8 : f32 to vector<1x2xf32>
    %9 = arith.maximumf %7, %8 : vector<1x2xf32>
    %c0_9 = arith.constant 0 : index
    %c0_10 = arith.constant 0 : index
    %10 = vector.load %arg4[%c0_9, %c0_10] : memref<2x8xf32, #tpu.memory_space<vmem>>, vector<2x8xf32>
    %cst_11 = arith.constant dense<0.000000e+00> : vector<1x8xf32>
    %11 = tpu.matmul %9, %10, %cst_11 {dimension_numbers = #tpu.dot_dimension_numbers<[1], [0], [0], [1], [0, 0, 1, 1], [], []>} : vector<1x2xf32>, vector<2x8xf32>, vector<1x8xf32> -> vector<1x8xf32>
    %c0_12 = arith.constant 0 : index
    %c0_13 = arith.constant 0 : index
    %12 = vector.load %arg5[%c0_12, %c0_13] : memref<1x8xf32, #tpu.memory_space<vmem>>, vector<1x8xf32>
    %13 = arith.addf %11, %12 : vector<1x8xf32>
    %cst_14 = arith.constant 3.000000e+00 : f32
    %14 = vector.broadcast %cst_14 : f32 to vector<1x8xf32>
    %15 = arith.addf %13, %14 : vector<1x8xf32>
    %cst_15 = arith.constant 0.000000e+00 : f32
    %cst_16 = arith.constant 6.000000e+00 : f32
    %16 = vector.broadcast %cst_15 : f32 to vector<1x8xf32>
    %17 = arith.maximumf %16, %15 : vector<1x8xf32>
    %18 = vector.broadcast %cst_16 : f32 to vector<1x8xf32>
    %19 = arith.minimumf %18, %17 : vector<1x8xf32>
    %cst_17 = arith.constant 0.166666672 : f32
    %20 = vector.broadcast %cst_17 : f32 to vector<1x8xf32>
    %21 = arith.mulf %19, %20 : vector<1x8xf32>
    %cst_18 = arith.constant dense<0.000000e+00> : vector<1x256xf32>
    %22 = vector.multi_reduction <add>, %0, %cst_18 [1] : vector<1x8x256xf32> to vector<1x256xf32>
    %cst_19 = arith.constant 1.250000e-01 : f32
    %23 = vector.broadcast %cst_19 : f32 to vector<1x256xf32>
    %24 = arith.mulf %22, %23 : vector<1x256xf32>
    %c0_20 = arith.constant 0 : index
    %c0_21 = arith.constant 0 : index
    %25 = vector.load %arg6[%c0_20, %c0_21] : memref<256x64xf32, #tpu.memory_space<vmem>>, vector<256x64xf32>
    %cst_22 = arith.constant dense<0.000000e+00> : vector<1x64xf32>
    %26 = tpu.matmul %24, %25, %cst_22 {dimension_numbers = #tpu.dot_dimension_numbers<[1], [0], [0], [1], [0, 0, 1, 1], [], []>} : vector<1x256xf32>, vector<256x64xf32>, vector<1x64xf32> -> vector<1x64xf32>
    %c0_23 = arith.constant 0 : index
    %c0_24 = arith.constant 0 : index
    %27 = vector.load %arg7[%c0_23, %c0_24] : memref<1x64xf32, #tpu.memory_space<vmem>>, vector<1x64xf32>
    %28 = arith.addf %26, %27 : vector<1x64xf32>
    %cst_25 = arith.constant 0.000000e+00 : f32
    %29 = vector.broadcast %cst_25 : f32 to vector<1x64xf32>
    %30 = arith.maximumf %28, %29 : vector<1x64xf32>
    %c0_26 = arith.constant 0 : index
    %c0_27 = arith.constant 0 : index
    %31 = vector.load %arg8[%c0_26, %c0_27] : memref<64x256xf32, #tpu.memory_space<vmem>>, vector<64x256xf32>
    %cst_28 = arith.constant dense<0.000000e+00> : vector<1x256xf32>
    %32 = tpu.matmul %30, %31, %cst_28 {dimension_numbers = #tpu.dot_dimension_numbers<[1], [0], [0], [1], [0, 0, 1, 1], [], []>} : vector<1x64xf32>, vector<64x256xf32>, vector<1x256xf32> -> vector<1x256xf32>
    %c0_29 = arith.constant 0 : index
    %c0_30 = arith.constant 0 : index
    %33 = vector.load %arg9[%c0_29, %c0_30] : memref<1x256xf32, #tpu.memory_space<vmem>>, vector<1x256xf32>
    %34 = arith.addf %32, %33 : vector<1x256xf32>
    %cst_31 = arith.constant 3.000000e+00 : f32
    %35 = vector.broadcast %cst_31 : f32 to vector<1x256xf32>
    %36 = arith.addf %34, %35 : vector<1x256xf32>
    %cst_32 = arith.constant 0.000000e+00 : f32
    %cst_33 = arith.constant 6.000000e+00 : f32
    %37 = vector.broadcast %cst_32 : f32 to vector<1x256xf32>
    %38 = arith.maximumf %37, %36 : vector<1x256xf32>
    %39 = vector.broadcast %cst_33 : f32 to vector<1x256xf32>
    %40 = arith.minimumf %39, %38 : vector<1x256xf32>
    %cst_34 = arith.constant 0.166666672 : f32
    %41 = vector.broadcast %cst_34 : f32 to vector<1x256xf32>
    %42 = arith.mulf %40, %41 : vector<1x256xf32>
    %cst_35 = arith.constant 5.000000e-01 : f32
    %43 = vector.broadcast %cst_35 : f32 to vector<1x256xf32>
    %44 = arith.subf %42, %43 : vector<1x256xf32>
    %cst_36 = arith.constant 1.000000e+00 : f32
    %45 = vector.broadcast %cst_36 : f32 to vector<1x256xf32>
    %46 = arith.addf %45, %44 : vector<1x256xf32>
    %47 = vector.shape_cast %46 : vector<1x256xf32> to vector<1x1x256xf32>
    %48 = vector.broadcast %47 : vector<1x1x256xf32> to vector<1x8x256xf32>
    %49 = arith.mulf %0, %48 : vector<1x8x256xf32>
    %50 = vector.shape_cast %21 : vector<1x8xf32> to vector<1x8x1xf32>
    %51 = vector.broadcast %50 : vector<1x8x1xf32> to vector<1x8x256xf32>
    %52 = arith.mulf %49, %51 : vector<1x8x256xf32>
    %c0_37 = arith.constant 0 : index
    %c0_38 = arith.constant 0 : index
    %c0_39 = arith.constant 0 : index
    %53 = vector.load %arg10[%c0_37, %c0_38, %c0_39] : memref<1x8x256xf32, #tpu.memory_space<vmem>>, vector<1x8x256xf32>
    tpu.vector_store %arg10[%c0_37, %c0_38, %c0_39], %52 {strides = array<i32>} : memref<1x8x256xf32, #tpu.memory_space<vmem>>, vector<1x8x256xf32>,
    return
  }
  func.func @transform_0(%arg0: i32) -> (i32, i32, i32) {
    %c0_i32 = arith.constant 0 : i32
    %c0_i32_0 = arith.constant 0 : i32
    %c0_i32_1 = arith.constant 0 : i32
    return %arg0, %c0_i32, %c0_i32_0 : i32, i32, i32
  }
  func.func @transform_1(%arg0: i32) -> (i32, i32) {
    %c0_i32 = arith.constant 0 : i32
    %c0_i32_0 = arith.constant 0 : i32
    %c0_i32_1 = arith.constant 0 : i32
    return %c0_i32, %c0_i32_0 : i32, i32
  }
  func.func @transform_2(%arg0: i32) -> (i32, i32) {
    %c0_i32 = arith.constant 0 : i32
    %c0_i32_0 = arith.constant 0 : i32
    %c0_i32_1 = arith.constant 0 : i32
    return %c0_i32, %c0_i32_0 : i32, i32
  }
  func.func @transform_3(%arg0: i32) -> (i32, i32) {
    %c0_i32 = arith.constant 0 : i32
    %c0_i32_0 = arith.constant 0 : i32
    %c0_i32_1 = arith.constant 0 : i32
    return %c0_i32, %c0_i32_0 : i32, i32
  }
  func.func @transform_4(%arg0: i32) -> (i32, i32) {
    %c0_i32 = arith.constant 0 : i32
    %c0_i32_0 = arith.constant 0 : i32
    %c0_i32_1 = arith.constant 0 : i32
    return %c0_i32, %c0_i32_0 : i32, i32
  }
  func.func @transform_5(%arg0: i32) -> (i32, i32) {
    %c0_i32 = arith.constant 0 : i32
    %c0_i32_0 = arith.constant 0 : i32
    %c0_i32_1 = arith.constant 0 : i32
    return %c0_i32, %c0_i32_0 : i32, i32
  }
  func.func @transform_6(%arg0: i32) -> (i32, i32) {
    %c0_i32 = arith.constant 0 : i32
    %c0_i32_0 = arith.constant 0 : i32
    %c0_i32_1 = arith.constant 0 : i32
    return %c0_i32, %c0_i32_0 : i32, i32
  }
  func.func @transform_7(%arg0: i32) -> (i32, i32) {
    %c0_i32 = arith.constant 0 : i32
    %c0_i32_0 = arith.constant 0 : i32
    %c0_i32_1 = arith.constant 0 : i32
    return %c0_i32, %c0_i32_0 : i32, i32
  }
  func.func @transform_8(%arg0: i32) -> (i32, i32) {
    %c0_i32 = arith.constant 0 : i32
    %c0_i32_0 = arith.constant 0 : i32
    %c0_i32_1 = arith.constant 0 : i32
    return %c0_i32, %c0_i32_0 : i32, i32
  }
  func.func @transform_9(%arg0: i32) -> (i32, i32, i32) {
    %c0_i32 = arith.constant 0 : i32
    %c0_i32_0 = arith.constant 0 : i32
    %c0_i32_1 = arith.constant 0 : i32
    return %arg0, %c0_i32, %c0_i32_0 : i32, i32, i32
  }
}

</mosaic_0001>

<llo_original>
// kernel: tpu_custom_call.1
$region0: #{tpu_custom_call.1}
  #allocation0 [shape = 'u32[]', space=smem, size = 0x4, offset = 0x4, fixed_abs, tag = 'smem constant byte address 0x4 - core index']
  #allocation1 [shape = 'u32[144,128]{1,0:T(1,128)}', space=vmem, size = 0x12000, scoped, tag = 'internal scratch']
  %s0 = inlined_call_operand.hbm [shape: f32[2,8,256], index: 0, kind: input, shape index: {}, may-alias: {0,9}]
  %s1 = inlined_call_operand.vmem [shape: f32[8,2], index: 1, kind: input, shape index: {}]
  %s2 = inlined_call_operand.vmem [shape: f32[1,2], index: 2, kind: input, shape index: {}]
  %s3 = inlined_call_operand.vmem [shape: f32[2,8], index: 3, kind: input, shape index: {}]
  %s4 = inlined_call_operand.vmem [shape: f32[1,8], index: 4, kind: input, shape index: {}]
  %s5 = inlined_call_operand.vmem [shape: f32[256,64], index: 5, kind: input, shape index: {}]
  %s6 = inlined_call_operand.vmem [shape: f32[1,64], index: 6, kind: input, shape index: {}]
  %s7 = inlined_call_operand.vmem [shape: f32[64,256], index: 7, kind: input, shape index: {}]
  %s8 = inlined_call_operand.vmem [shape: f32[1,256], index: 8, kind: input, shape index: {}]
  %s9 = inlined_call_operand.hbm [shape: f32[2,8,256], index: 9, kind: output, shape index: {}, may-alias: {0,9}]
  %s10 = sld [smem:[#allocation0]]
  $region73: #{tpu_custom_call.1} parent=0
    _
  %s12 = ssub.s32 1, %s10
  %s13 = scalar_select 0, %s12, %s10
  $region1: #{tpu_custom_call.1} parent=0
    #allocation2 [shape = 'u8[16384]{0}', space=vmem, size = 0x4000, scoped, tag = 'input window, operand 0']
    #allocation3 [shape = 's32[2]{0}', space=sflag, size = 0x8, scoped, tag = 'scoped memory for tpu_custom_call.1']
    #allocation4 [shape = 's32[2]{0}', space=sflag, size = 0x8, scoped, tag = 'scoped memory for tpu_custom_call.1']
    #allocation5 [shape = 'u8[16384]{0}', space=vmem, size = 0x4000, scoped, tag = 'output window, operand 0']
    %14 = vsyncpa [#allocation3], 0
    %s15 = scalar_lea.sflag [#allocation3], 1
    %16 = vsyncpa %s15, 0
    %17 = vsyncpa [#allocation4], 0
    %s18 = scalar_lea.sflag [#allocation4], 1
    %19 = vsyncpa %s18, 0
    loop: start=0, step=1, limit=4
    $region2: #{tpu_custom_call.1} parent=1 // loop_pre_header
      _
    $region3: #{tpu_custom_call.1} parent=1 // loop_header
      %s21 = sphi 0, %s25
      %p22 = scmp.ge.s32.totalorder %s21, 4
      %s31 = sphi 0, %s33
      %s34 = sphi 0, %s31
      %s35 = sphi 0, %s34
      %s51 = sphi 0, %s35
      %s55 = sphi 0, %s55
      %s57 = sphi 0, %s55
      %s58 = sphi 0, %s57
      %s72 = sphi 0, %s58
      %s76 = sphi 0, %s76
      %s78 = sphi 0, %s76
      %s79 = sphi 0, %s78
      %s93 = sphi 0, %s79
      %s97 = sphi 0, %s97
      %s99 = sphi 0, %s97
      %s100 = sphi 0, %s99
      %s114 = sphi 0, %s100
      %s118 = sphi 0, %s118
      %s120 = sphi 0, %s118
      %s121 = sphi 0, %s120
      %s135 = sphi 0, %s121
      %s139 = sphi 0, %s139
      %s141 = sphi 0, %s139
      %s142 = sphi 0, %s141
      %s156 = sphi 0, %s142
      %s160 = sphi 0, %s160
      %s162 = sphi 0, %s160
      %s163 = sphi 0, %s162
      %s177 = sphi 0, %s163
      %s181 = sphi 0, %s181
      %s183 = sphi 0, %s181
      %s184 = sphi 0, %s183
      %s198 = sphi 0, %s184
      %s202 = sphi 0, %s202
      %s204 = sphi 0, %s202
      %s205 = sphi 0, %s204
      %s219 = sphi 0, %s205
      %s225 = sphi 0, %s227
      %s228 = sphi 0, %s225
      %s229 = sphi 0, %s228
      %s245 = sphi 0, %s229
    $region4: #{tpu_custom_call.1} parent=1 // loop_header_branch
      %24 = sbr.rel (%p22) target = $region8
    $region5: #{tpu_custom_call.1} parent=1 // loop_body
      %s26 = ssub.s32 %s21, 1
      %s27 = ssub.s32 %s21, 2
      %s28 = sadd.s32 %s21, 1
      %s29 = ssub.s32 %s21, %s28
      %p30 = scmp.eq.s32.totalorder %s29, 0
      %s32 = sadd.s32 %s31, 1
      %s33 = scalar_select %p30, %s31, %s32
      %p36 = pneg %p30
      %p37 = scmp.eq.s32.totalorder %s21, 1
      %p38 = por %p36, %p37
      %p39 = scmp.ne.s32.totalorder %s31, %s34
      %p40 = scmp.eq.s32.totalorder %s21, 0
      %p41 = por %p39, %p40
      %p42 = scmp.ne.s32.totalorder %s31, %s34
      %p43 = scmp.eq.s32.totalorder %s26, 1
      %p44 = por %p42, %p43
      %p45 = scmp.ne.s32.totalorder %s34, %s35
      %p46 = scmp.eq.s32.totalorder %s26, 0
      %p47 = por %p45, %p46
      %p48 = scmp.ne.s32.totalorder %s34, %s35
      %p49 = scmp.eq.s32.totalorder %s27, 1
      %p50 = por %p48, %p49
      %p52 = scmp.ne.s32.totalorder %s35, %s51
      %p53 = scmp.eq.s32.totalorder %s27, 0
      %p54 = por %p52, %p53
      %s56 = sadd.s32 %s55, 1
      %p59 = scmp.eq.s32.totalorder %s21, 1
      %p60 = scmp.ne.s32.totalorder %s55, %s57
      %p61 = scmp.eq.s32.totalorder %s21, 0
      %p62 = por %p60, %p61
      %p63 = scmp.ne.s32.totalorder %s55, %s57
      %p64 = scmp.eq.s32.totalorder %s26, 1
      %p65 = por %p63, %p64
      %p66 = scmp.ne.s32.totalorder %s57, %s58
      %p67 = scmp.eq.s32.totalorder %s26, 0
      %p68 = por %p66, %p67
      %p69 = scmp.ne.s32.totalorder %s57, %s58
      %p70 = scmp.eq.s32.totalorder %s27, 1
      %p71 = por %p69, %p70
      %p73 = scmp.ne.s32.totalorder %s58, %s72
      %p74 = scmp.eq.s32.totalorder %s27, 0
      %p75 = por %p73, %p74
      %s77 = sadd.s32 %s76, 1
      %p80 = scmp.eq.s32.totalorder %s21, 1
      %p81 = scmp.ne.s32.totalorder %s76, %s78
      %p82 = scmp.eq.s32.totalorder %s21, 0
      %p83 = por %p81, %p82
      %p84 = scmp.ne.s32.totalorder %s76, %s78
      %p85 = scmp.eq.s32.totalorder %s26, 1
      %p86 = por %p84, %p85
      %p87 = scmp.ne.s32.totalorder %s78, %s79
      %p88 = scmp.eq.s32.totalorder %s26, 0
      %p89 = por %p87, %p88
      %p90 = scmp.ne.s32.totalorder %s78, %s79
      %p91 = scmp.eq.s32.totalorder %s27, 1
      %p92 = por %p90, %p91
      %p94 = scmp.ne.s32.totalorder %s79, %s93
      %p95 = scmp.eq.s32.totalorder %s27, 0
      %p96 = por %p94, %p95
      %s98 = sadd.s32 %s97, 1
      %p101 = scmp.eq.s32.totalorder %s21, 1
      %p102 = scmp.ne.s32.totalorder %s97, %s99
      %p103 = scmp.eq.s32.totalorder %s21, 0
      %p104 = por %p102, %p103
      %p105 = scmp.ne.s32.totalorder %s97, %s99
      %p106 = scmp.eq.s32.totalorder %s26, 1
      %p107 = por %p105, %p106
      %p108 = scmp.ne.s32.totalorder %s99, %s100
      %p109 = scmp.eq.s32.totalorder %s26, 0
      %p110 = por %p108, %p109
      %p111 = scmp.ne.s32.totalorder %s99, %s100
      %p112 = scmp.eq.s32.totalorder %s27, 1
      %p113 = por %p111, %p112
      %p115 = scmp.ne.s32.totalorder %s100, %s114
      %p116 = scmp.eq.s32.totalorder %s27, 0
      %p117 = por %p115, %p116
      %s119 = sadd.s32 %s118, 1
      %p122 = scmp.eq.s32.totalorder %s21, 1
      %p123 = scmp.ne.s32.totalorder %s118, %s120
      %p124 = scmp.eq.s32.totalorder %s21, 0
      %p125 = por %p123, %p124
      %p126 = scmp.ne.s32.totalorder %s118, %s120
      %p127 = scmp.eq.s32.totalorder %s26, 1
      %p128 = por %p126, %p127
      %p129 = scmp.ne.s32.totalorder %s120, %s121
      %p130 = scmp.eq.s32.totalorder %s26, 0
      %p131 = por %p129, %p130
      %p132 = scmp.ne.s32.totalorder %s120, %s121
      %p133 = scmp.eq.s32.totalorder %s27, 1
      %p134 = por %p132, %p133
      %p136 = scmp.ne.s32.totalorder %s121, %s135
      %p137 = scmp.eq.s32.totalorder %s27, 0
      %p138 = por %p136, %p137
      %s140 = sadd.s32 %s139, 1
      %p143 = scmp.eq.s32.totalorder %s21, 1
      %p144 = scmp.ne.s32.totalorder %s139, %s141
      %p145 = scmp.eq.s32.totalorder %s21, 0
      %p146 = por %p144, %p145
      %p147 = scmp.ne.s32.totalorder %s139, %s141
      %p148 = scmp.eq.s32.totalorder %s26, 1
      %p149 = por %p147, %p148
      %p150 = scmp.ne.s32.totalorder %s141, %s142
      %p151 = scmp.eq.s32.totalorder %s26, 0
      %p152 = por %p150, %p151
      %p153 = scmp.ne.s32.totalorder %s141, %s142
      %p154 = scmp.eq.s32.totalorder %s27, 1
      %p155 = por %p153, %p154
      %p157 = scmp.ne.s32.totalorder %s142, %s156
      %p158 = scmp.eq.s32.totalorder %s27, 0
      %p159 = por %p157, %p158
      %s161 = sadd.s32 %s160, 1
      %p164 = scmp.eq.s32.totalorder %s21, 1
      %p165 = scmp.ne.s32.totalorder %s160, %s162
      %p166 = scmp.eq.s32.totalorder %s21, 0
      %p167 = por %p165, %p166
      %p168 = scmp.ne.s32.totalorder %s160, %s162
      %p169 = scmp.eq.s32.totalorder %s26, 1
      %p170 = por %p168, %p169
      %p171 = scmp.ne.s32.totalorder %s162, %s163
      %p172 = scmp.eq.s32.totalorder %s26, 0
      %p173 = por %p171, %p172
      %p174 = scmp.ne.s32.totalorder %s162, %s163
      %p175 = scmp.eq.s32.totalorder %s27, 1
      %p176 = por %p174, %p175
      %p178 = scmp.ne.s32.totalorder %s163, %s177
      %p179 = scmp.eq.s32.totalorder %s27, 0
      %p180 = por %p178, %p179
      %s182 = sadd.s32 %s181, 1
      %p185 = scmp.eq.s32.totalorder %s21, 1
      %p186 = scmp.ne.s32.totalorder %s181, %s183
      %p187 = scmp.eq.s32.totalorder %s21, 0
      %p188 = por %p186, %p187
      %p189 = scmp.ne.s32.totalorder %s181, %s183
      %p190 = scmp.eq.s32.totalorder %s26, 1
      %p191 = por %p189, %p190
      %p192 = scmp.ne.s32.totalorder %s183, %s184
      %p193 = scmp.eq.s32.totalorder %s26, 0
      %p194 = por %p192, %p193
      %p195 = scmp.ne.s32.totalorder %s183, %s184
      %p196 = scmp.eq.s32.totalorder %s27, 1
      %p197 = por %p195, %p196
      %p199 = scmp.ne.s32.totalorder %s184, %s198
      %p200 = scmp.eq.s32.totalorder %s27, 0
      %p201 = por %p199, %p200
      %s203 = sadd.s32 %s202, 1
      %p206 = scmp.eq.s32.totalorder %s21, 1
      %p207 = scmp.ne.s32.totalorder %s202, %s204
      %p208 = scmp.eq.s32.totalorder %s21, 0
      %p209 = por %p207, %p208
      %p210 = scmp.ne.s32.totalorder %s202, %s204
      %p211 = scmp.eq.s32.totalorder %s26, 1
      %p212 = por %p210, %p211
      %p213 = scmp.ne.s32.totalorder %s204, %s205
      %p214 = scmp.eq.s32.totalorder %s26, 0
      %p215 = por %p213, %p214
      %p216 = scmp.ne.s32.totalorder %s204, %s205
      %p217 = scmp.eq.s32.totalorder %s27, 1
      %p218 = por %p216, %p217
      %p220 = scmp.ne.s32.totalorder %s205, %s219
      %p221 = scmp.eq.s32.totalorder %s27, 0
      %p222 = por %p220, %p221
      %s223 = ssub.s32 %s21, %s28
      %p224 = scmp.eq.s32.totalorder %s223, 0
      %s226 = sadd.s32 %s225, 1
      %s227 = scalar_select %p224, %s225, %s226
      %p230 = pneg %p224
      %p231 = scmp.eq.s32.totalorder %s21, 1
      %p232 = por %p230, %p231
      %p233 = scmp.ne.s32.totalorder %s225, %s228
      %p234 = scmp.eq.s32.totalorder %s21, 0
      %p235 = por %p233, %p234
      %p236 = scmp.ne.s32.totalorder %s225, %s228
      %p237 = scmp.eq.s32.totalorder %s26, 1
      %p238 = por %p236, %p237
      %p239 = scmp.ne.s32.totalorder %s228, %s229
      %p240 = scmp.eq.s32.totalorder %s26, 0
      %p241 = por %p239, %p240
      %p242 = scmp.ne.s32.totalorder %s228, %s229
      %p243 = scmp.eq.s32.totalorder %s27, 1
      %p244 = por %p242, %p243
      %p246 = scmp.ne.s32.totalorder %s229, %s245
      %p247 = scmp.eq.s32.totalorder %s27, 0
      %p248 = por %p246, %p247
      %p249 = scmp.le.s32.totalorder 1, %s21
      %p250 = scmp.lt.s32.totalorder %s21, 3
      %p251 = pnand %p249, %p250
      %p252 = pneg %p251
      // Predicated region
      $region9: #{tpu_custom_call.1} parent=5 // pred_check
        _
      $region10: #{tpu_custom_call.1} parent=5 // pred_check_branch
        %254 = sbr.rel (%p251) target = $region12
      $region11: #{tpu_custom_call.1} parent=5 // pred_region
        %s255 = ssub.s32 %s21, 1
        // Predicated region
        $region13: #{tpu_custom_call.1} parent=11 // pred_check
          %p256 = pneg %p68
        $region14: #{tpu_custom_call.1} parent=11 // pred_check_branch
          %258 = sbr.rel (%p256) target = $region16
        $region15: #{tpu_custom_call.1} parent=11 // pred_region
          _
        $region16: #{tpu_custom_call.1} parent=11 // pred_fallthru
          _
        // Predicated region
        $region17: #{tpu_custom_call.1} parent=11 // pred_check
          %p259 = pneg %p89
        $region18: #{tpu_custom_call.1} parent=11 // pred_check_branch
          %261 = sbr.rel (%p259) target = $region20
        $region19: #{tpu_custom_call.1} parent=11 // pred_region
          _
        $region20: #{tpu_custom_call.1} parent=11 // pred_fallthru
          _
        // Predicated region
        $region21: #{tpu_custom_call.1} parent=11 // pred_check
          %p262 = pneg %p110
        $region22: #{tpu_custom_call.1} parent=11 // pred_check_branch
          %264 = sbr.rel (%p262) target = $region24
        $region23: #{tpu_custom_call.1} parent=11 // pred_region
          _
        $region24: #{tpu_custom_call.1} parent=11 // pred_fallthru
          _
        // Predicated region
        $region25: #{tpu_custom_call.1} parent=11 // pred_check
          %p265 = pneg %p131
        $region26: #{tpu_custom_call.1} parent=11 // pred_check_branch
          %267 = sbr.rel (%p265) target = $region28
        $region27: #{tpu_custom_call.1} parent=11 // pred_region
          _
        $region28: #{tpu_custom_call.1} parent=11 // pred_fallthru
          _
        // Predicated region
        $region29: #{tpu_custom_call.1} parent=11 // pred_check
          %p268 = pneg %p152
        $region30: #{tpu_custom_call.1} parent=11 // pred_check_branch
          %270 = sbr.rel (%p268) target = $region32
        $region31: #{tpu_custom_call.1} parent=11 // pred_region
          _
        $region32: #{tpu_custom_call.1} parent=11 // pred_fallthru
          _
        // Predicated region
        $region33: #{tpu_custom_call.1} parent=11 // pred_check
          %p271 = pneg %p173
        $region34: #{tpu_custom_call.1} parent=11 // pred_check_branch
          %273 = sbr.rel (%p271) target = $region36
        $region35: #{tpu_custom_call.1} parent=11 // pred_region
          _
        $region36: #{tpu_custom_call.1} parent=11 // pred_fallthru
          _
        // Predicated region
        $region37: #{tpu_custom_call.1} parent=11 // pred_check
          %p274 = pneg %p194
        $region38: #{tpu_custom_call.1} parent=11 // pred_check_branch
          %276 = sbr.rel (%p274) target = $region40
        $region39: #{tpu_custom_call.1} parent=11 // pred_region
          _
        $region40: #{tpu_custom_call.1} parent=11 // pred_fallthru
          _
        // Predicated region
        $region41: #{tpu_custom_call.1} parent=11 // pred_check
          %p277 = pneg %p215
        $region42: #{tpu_custom_call.1} parent=11 // pred_check_branch
          %279 = sbr.rel (%p277) target = $region44
        $region43: #{tpu_custom_call.1} parent=11 // pred_region
          _
        $region44: #{tpu_custom_call.1} parent=11 // pred_fallthru
          _
      $region12: #{tpu_custom_call.1} parent=5 // pred_fallthru
        _
      %p280 = scmp.lt.s32.totalorder %s21, 2
      // Predicated region
      $region45: #{tpu_custom_call.1} parent=5 // pred_check
        %p281 = pneg %p280
      $region46: #{tpu_custom_call.1} parent=5 // pred_check_branch
        %283 = sbr.rel (%p281) target = $region48
      $region47: #{tpu_custom_call.1} parent=5 // pred_region
        // Predicated region
        $region49: #{tpu_custom_call.1} parent=47 // pred_check
          %p284 = pneg %p41
        $region50: #{tpu_custom_call.1} parent=47 // pred_check_branch
          %286 = sbr.rel (%p284) target = $region52
        $region51: #{tpu_custom_call.1} parent=47 // pred_region
          %s287 = sand.u32 %s31, 1
          %s288 = scalar_lea.sflag [#allocation3], %s287
          %s289 = sand.u32 %s31, 1
          %s290 = smul.addr %s289, 16
          %s291 = scalar_lea.vmem [#allocation2], %s290
          %s293 = ssub.s32 256, 256
          %294 = vsyncadd %s288, %s293
          %s295 = smul.addr %s21, 2
          %s296 = smul.addr %s295, 128
          %s297 = scalar_lea.hbm %s0, %s296
          %s299 = sshll.u32 %s291, 4
          %s300 = int_to_ptr.vmem [resolvable:$true] %s299
          %302 = dma.hbm_to_vmem [thread:$0]  %s297, 256, %s300, %s288
        $region52: #{tpu_custom_call.1} parent=47 // pred_fallthru
          _
      $region48: #{tpu_custom_call.1} parent=5 // pred_fallthru
        _
      %p303 = scmp.le.s32.totalorder 1, %s21
      %p304 = scmp.lt.s32.totalorder %s21, 3
      %p305 = pnand %p303, %p304
      %p306 = pneg %p305
      // Predicated region
      $region53: #{tpu_custom_call.1} parent=5 // pred_check
        _
      $region54: #{tpu_custom_call.1} parent=5 // pred_check_branch
        %308 = sbr.rel (%p305) target = $region56
      $region55: #{tpu_custom_call.1} parent=5 // pred_region
        %s309 = ssub.s32 %s21, 1
        %s310 = sand.u32 %s34, 1
        %s311 = scalar_lea.sflag [#allocation3], %s310
        %s312 = sand.u32 %s34, 1
        %s313 = smul.addr %s312, 16
        %s314 = scalar_lea.vmem [#allocation2], %s313
        // Predicated region
        $region57: #{tpu_custom_call.1} parent=55 // pred_check
          %p315 = pneg %p47
        $region58: #{tpu_custom_call.1} parent=55 // pred_check_branch
          %317 = sbr.rel (%p315) target = $region60
        $region59: #{tpu_custom_call.1} parent=55 // pred_region
          %318 = dma.done %s311, 256
        $region60: #{tpu_custom_call.1} parent=55 // pred_fallthru
          _
        %s319 = sand.u32 %s34, 1
        %s320 = scalar_lea.sflag [#allocation3], %s319
        %s321 = sand.u32 %s34, 1
        %s322 = smul.addr %s321, 16
        %s323 = scalar_lea.vmem [#allocation2], %s322
        %p324 = pneg %p47
        %p325 = pneg %p44
        %p326 = pneg %p68
        %p327 = pneg %p65
        %p328 = pneg %p89
        %p329 = pneg %p86
        %p330 = pneg %p110
        %p331 = pneg %p107
        %p332 = pneg %p131
        %p333 = pneg %p128
        %p334 = pneg %p152
        %p335 = pneg %p149
        %p336 = pneg %p173
        %p337 = pneg %p170
        %p338 = pneg %p194
        %p339 = pneg %p191
        %p340 = pneg %p215
        %p341 = pneg %p212
        %p342 = pneg %p241
        %p343 = pneg %p238
        %s344 = sand.u32 %s228, 1
        %s345 = scalar_lea.sflag [#allocation4], %s344
        %s346 = sand.u32 %s228, 1
        %s347 = smul.addr %s346, 16
        %s348 = scalar_lea.vmem [#allocation5], %s347
        %v349 = vld [vmem:[%s314] sm:$0xff]
        %v350 = vld [vmem:[%s314 + $0x8] sm:$0xff]
        %v351 = vadd.f32 %v349, %v350
        %352 = vadd.xlane.f32.xlu0 %v351
        %v353 = vpop.xlane.xlu0 %352
        %v354 = vmul.f32 %v353, 0.00390625
        %v355 = vld [vmem:[%s1] sm:$0xff]
        %v356 = vld [vmem:[%s2] sm:$0x1]
        %v358 = vlaneseq
        %v359 = vand.u32 %v358, 127
        %v360 = vlaneseq
        %v361 = vshrl.u32 %v360, 7
        %v362 = vsub.s32 %v359, %v361
        %v363 = vrot.slane %v354, %v362
        %vm364 = vcmask 64512
        %v365 = vsel %vm364, %v363, 0
        %367 = vmatprep.subr.mxu0 0.0
        %368 = vmatpush1.msra.mxu0 0.0
        %369 = vmatprep.subr.mxu0 0.0
        %370 = vmatpush1.msra.mxu0 0.0
        %371 = vmatprep.subr.mxu0 0.0
        %372 = vmatpush1.msra.mxu0 0.0
        %373 = vmatprep.subr.mxu0 0.0
        %374 = vmatpush1.msra.mxu0 0.0
        %375 = vmatprep.subr.mxu0 0.0
        %376 = vmatpush1.msra.mxu0 0.0
        %377 = vmatprep.subr.mxu0 0.0
        %378 = vmatpush1.msra.mxu0 0.0
        %379 = vmatprep.subr.mxu0 0.0
        %380 = vmatpush1.msra.mxu0 0.0
        %381 = vmatprep.subr.mxu0 0.0
        %382 = vmatpush1.msra.mxu0 0.0
        %383 = vmatprep.subr.mxu0 0.0
        %384 = vmatpush1.msra.mxu0 0.0
        %385 = vmatprep.subr.mxu0 0.0
        %386 = vmatpush1.msra.mxu0 0.0
        %387 = vmatprep.subr.mxu0 0.0
        %388 = vmatpush1.msra.mxu0 0.0
        %389 = vmatprep.subr.mxu0 0.0
        %390 = vmatpush1.msra.mxu0 0.0
        %391 = vmatprep.subr.mxu0 0.0
        %392 = vmatpush1.msra.mxu0 0.0
        %393 = vmatprep.subr.mxu0 0.0
        %394 = vmatpush1.msra.mxu0 0.0
        %395 = vmatprep.subr.mxu0 0.0
        %396 = vmatpush1.msra.mxu0 0.0
        %397 = vmatprep.subr.mxu0 0.0
        %398 = vmatpush1.msra.mxu0 %v355
        %399 = vmatprep.subr.mxu0 0.0
        %400 = vmatpush2.msra.mxu0 0.0
        %401 = vmatprep.subr.mxu0 0.0
        %402 = vmatpush2.msra.mxu0 0.0
        %403 = vmatprep.subr.mxu0 0.0
        %404 = vmatpush2.msra.mxu0 0.0
        %405 = vmatprep.subr.mxu0 0.0
        %406 = vmatpush2.msra.mxu0 0.0
        %407 = vmatprep.subr.mxu0 0.0
        %408 = vmatpush2.msra.mxu0 0.0
        %409 = vmatprep.subr.mxu0 0.0
        %410 = vmatpush2.msra.mxu0 0.0
        %411 = vmatprep.subr.mxu0 0.0
        %412 = vmatpush2.msra.mxu0 0.0
        %413 = vmatprep.subr.mxu0 0.0
        %414 = vmatpush2.msra.mxu0 0.0
        %415 = vmatprep.subr.mxu0 0.0
        %416 = vmatpush2.msra.mxu0 0.0
        %417 = vmatprep.subr.mxu0 0.0
        %418 = vmatpush2.msra.mxu0 0.0
        %419 = vmatprep.subr.mxu0 0.0
        %420 = vmatpush2.msra.mxu0 0.0
        %421 = vmatprep.subr.mxu0 0.0
        %422 = vmatpush2.msra.mxu0 0.0
        %423 = vmatprep.subr.mxu0 0.0
        %424 = vmatpush2.msra.mxu0 0.0
        %425 = vmatprep.subr.mxu0 0.0
        %426 = vmatpush2.msra.mxu0 0.0
        %427 = vmatprep.subr.mxu0 0.0
        %428 = vmatpush2.msra.mxu0 0.0
        %429 = vmatprep.subr.mxu0 0.0
        %430 = vmatpush2.msra.mxu0 0.0
        %431 = vmatprep.mubr.f32.mxu0 0.0
        %432 = vmatmul.mubr.f32.gmra.mxu0 %v365
        %v433 = vpop.f32.mrf.mxu0
        %v434 = vadd.f32 %v356, %v433
        %v435 = vpop.f32.mrf.mxu0
        %436 = vdwg.mxu0
        %v437 = vmax.f32 %v434, 0.0
        %v438 = vld [vmem:[%s3] sm:$0x3]
        %v439 = vld [vmem:[%s4] sm:$0x1]
        %vm440 = vcmask 15360
        %v442 = vsel %vm440, %v437, 0
        %vm444 = vcmask 1041408
        %v446 = vsel %vm444, %v438, 0
        %448 = vmatprep.subr.mxu0 0.0
        %449 = vmatpush1.msra.mxu0 0.0
        %450 = vmatprep.subr.mxu0 0.0
        %451 = vmatpush1.msra.mxu0 0.0
        %452 = vmatprep.subr.mxu0 0.0
        %453 = vmatpush1.msra.mxu0 0.0
        %454 = vmatprep.subr.mxu0 0.0
        %455 = vmatpush1.msra.mxu0 0.0
        %456 = vmatprep.subr.mxu0 0.0
        %457 = vmatpush1.msra.mxu0 0.0
        %458 = vmatprep.subr.mxu0 0.0
        %459 = vmatpush1.msra.mxu0 0.0
        %460 = vmatprep.subr.mxu0 0.0
        %461 = vmatpush1.msra.mxu0 0.0
        %462 = vmatprep.subr.mxu0 0.0
        %463 = vmatpush1.msra.mxu0 0.0
        %464 = vmatprep.subr.mxu0 0.0
        %465 = vmatpush1.msra.mxu0 0.0
        %466 = vmatprep.subr.mxu0 0.0
        %467 = vmatpush1.msra.mxu0 0.0
        %468 = vmatprep.subr.mxu0 0.0
        %469 = vmatpush1.msra.mxu0 0.0
        %470 = vmatprep.subr.mxu0 0.0
        %471 = vmatpush1.msra.mxu0 0.0
        %472 = vmatprep.subr.mxu0 0.0
        %473 = vmatpush1.msra.mxu0 0.0
        %474 = vmatprep.subr.mxu0 0.0
        %475 = vmatpush1.msra.mxu0 0.0
        %476 = vmatprep.subr.mxu0 0.0
        %477 = vmatpush1.msra.mxu0 0.0
        %478 = vmatprep.subr.mxu0 0.0
        %479 = vmatpush1.msra.mxu0 %v446
        %480 = vmatprep.subr.mxu0 0.0
        %481 = vmatpush2.msra.mxu0 0.0
        %482 = vmatprep.subr.mxu0 0.0
        %483 = vmatpush2.msra.mxu0 0.0
        %484 = vmatprep.subr.mxu0 0.0
        %485 = vmatpush2.msra.mxu0 0.0
        %486 = vmatprep.subr.mxu0 0.0
        %487 = vmatpush2.msra.mxu0 0.0
        %488 = vmatprep.subr.mxu0 0.0
        %489 = vmatpush2.msra.mxu0 0.0
        %490 = vmatprep.subr.mxu0 0.0
        %491 = vmatpush2.msra.mxu0 0.0
        %492 = vmatprep.subr.mxu0 0.0
        %493 = vmatpush2.msra.mxu0 0.0
        %494 = vmatprep.subr.mxu0 0.0
        %495 = vmatpush2.msra.mxu0 0.0
        %496 = vmatprep.subr.mxu0 0.0
        %497 = vmatpush2.msra.mxu0 0.0
        %498 = vmatprep.subr.mxu0 0.0
        %499 = vmatpush2.msra.mxu0 0.0
        %500 = vmatprep.subr.mxu0 0.0
        %501 = vmatpush2.msra.mxu0 0.0
        %502 = vmatprep.subr.mxu0 0.0
        %503 = vmatpush2.msra.mxu0 0.0
        %504 = vmatprep.subr.mxu0 0.0
        %505 = vmatpush2.msra.mxu0 0.0
        %506 = vmatprep.subr.mxu0 0.0
        %507 = vmatpush2.msra.mxu0 0.0
        %508 = vmatprep.subr.mxu0 0.0
        %509 = vmatpush2.msra.mxu0 0.0
        %510 = vmatprep.subr.mxu0 0.0
        %511 = vmatpush2.msra.mxu0 0.0
        %512 = vmatprep.mubr.f32.mxu0 0.0
        %513 = vmatmul.mubr.f32.gmra.mxu0 %v442
        %v514 = vpop.f32.mrf.mxu0
        %v515 = vadd.f32 %v439, %v514
        %v516 = vpop.f32.mrf.mxu0
        %517 = vdwg.mxu0
        %v518 = vadd.f32 %v515, 3.0
        %v519 = vmax.f32 %v518, 0.0
        %v520 = vmin.f32 %v519, 6.0
        %v521 = vmul.f32 %v520, 0.16666667
        %v522 = vrot.slane %v349, 4
        %v523 = vadd.f32 %v349, %v522
        %v524 = vrot.slane %v523, 2
        %v525 = vadd.f32 %v523, %v524
        %v526 = vrot.slane %v525, 1
        %v527 = vadd.f32 %v525, %v526
        %v528 = vrot.slane %v350, 4
        %v529 = vadd.f32 %v350, %v528
        %v530 = vrot.slane %v529, 2
        %v531 = vadd.f32 %v529, %v530
        %v532 = vrot.slane %v531, 1
        %v533 = vadd.f32 %v531, %v532
        %v534 = vmul.f32 %v527, 0.125
        %v535 = vmul.f32 %v533, 0.125
        %v536 = vld [vmem:[%s5] sm:$0xff]
        %v537 = vld [vmem:[%s5 + $0x8] sm:$0xff]
        %v538 = vld [vmem:[%s5 + $0x10] sm:$0xff]
        %v539 = vld [vmem:[%s5 + $0x18] sm:$0xff]
        %v540 = vld [vmem:[%s5 + $0x20] sm:$0xff]
        %v541 = vld [vmem:[%s5 + $0x28] sm:$0xff]
        %v542 = vld [vmem:[%s5 + $0x30] sm:$0xff]
        %v543 = vld [vmem:[%s5 + $0x38] sm:$0xff]
        %v544 = vld [vmem:[%s5 + $0x40] sm:$0xff]
        %v545 = vld [vmem:[%s5 + $0x48] sm:$0xff]
        %v546 = vld [vmem:[%s5 + $0x50] sm:$0xff]
        %v547 = vld [vmem:[%s5 + $0x58] sm:$0xff]
        %v548 = vld [vmem:[%s5 + $0x60] sm:$0xff]
        %v549 = vld [vmem:[%s5 + $0x68] sm:$0xff]
        %v550 = vld [vmem:[%s5 + $0x70] sm:$0xff]
        %v551 = vld [vmem:[%s5 + $0x78] sm:$0xff]
        %v552 = vld [vmem:[%s5 + $0x80] sm:$0xff]
        %v553 = vld [vmem:[%s5 + $0x88] sm:$0xff]
        %v554 = vld [vmem:[%s5 + $0x90] sm:$0xff]
        %v555 = vld [vmem:[%s5 + $0x98] sm:$0xff]
        %v556 = vld [vmem:[%s5 + $0xa0] sm:$0xff]
        %v557 = vld [vmem:[%s5 + $0xa8] sm:$0xff]
        %v558 = vld [vmem:[%s5 + $0xb0] sm:$0xff]
        %v559 = vld [vmem:[%s5 + $0xb8] sm:$0xff]
        %v560 = vld [vmem:[%s5 + $0xc0] sm:$0xff]
        %v561 = vld [vmem:[%s5 + $0xc8] sm:$0xff]
        %v562 = vld [vmem:[%s5 + $0xd0] sm:$0xff]
        %v563 = vld [vmem:[%s5 + $0xd8] sm:$0xff]
        %v564 = vld [vmem:[%s5 + $0xe0] sm:$0xff]
        %v565 = vld [vmem:[%s5 + $0xe8] sm:$0xff]
        %v566 = vld [vmem:[%s5 + $0xf0] sm:$0xff]
        %v567 = vld [vmem:[%s5 + $0xf8] sm:$0xff]
        %v568 = vld [vmem:[%s6] sm:$0x1]
        %569 = vmatprep.subr.mxu0 0.0
        %570 = vmatpush1.msra.mxu0 %v551
        %571 = vmatprep.subr.mxu0 0.0
        %572 = vmatpush1.msra.mxu0 %v550
        %573 = vmatprep.subr.mxu0 0.0
        %574 = vmatpush1.msra.mxu0 %v549
        %575 = vmatprep.subr.mxu0 0.0
        %576 = vmatpush1.msra.mxu0 %v548
        %577 = vmatprep.subr.mxu0 0.0
        %578 = vmatpush1.msra.mxu0 %v547
        %579 = vmatprep.subr.mxu0 0.0
        %580 = vmatpush1.msra.mxu0 %v546
        %581 = vmatprep.subr.mxu0 0.0
        %582 = vmatpush1.msra.mxu0 %v545
        %583 = vmatprep.subr.mxu0 0.0
        %584 = vmatpush1.msra.mxu0 %v544
        %585 = vmatprep.subr.mxu0 0.0
        %586 = vmatpush1.msra.mxu0 %v543
        %587 = vmatprep.subr.mxu0 0.0
        %588 = vmatpush1.msra.mxu0 %v542
        %589 = vmatprep.subr.mxu0 0.0
        %590 = vmatpush1.msra.mxu0 %v541
        %591 = vmatprep.subr.mxu0 0.0
        %592 = vmatpush1.msra.mxu0 %v540
        %593 = vmatprep.subr.mxu0 0.0
        %594 = vmatpush1.msra.mxu0 %v539
        %595 = vmatprep.subr.mxu0 0.0
        %596 = vmatpush1.msra.mxu0 %v538
        %597 = vmatprep.subr.mxu0 0.0
        %598 = vmatpush1.msra.mxu0 %v537
        %599 = vmatprep.subr.mxu0 0.0
        %600 = vmatpush1.msra.mxu0 %v536
        %601 = vmatprep.subr.mxu0 0.0
        %602 = vmatpush2.msra.mxu0 %v567
        %603 = vmatprep.subr.mxu0 0.0
        %604 = vmatpush2.msra.mxu0 %v566
        %605 = vmatprep.subr.mxu0 0.0
        %606 = vmatpush2.msra.mxu0 %v565
        %607 = vmatprep.subr.mxu0 0.0
        %608 = vmatpush2.msra.mxu0 %v564
        %609 = vmatprep.subr.mxu0 0.0
        %610 = vmatpush2.msra.mxu0 %v563
        %611 = vmatprep.subr.mxu0 0.0
        %612 = vmatpush2.msra.mxu0 %v562
        %613 = vmatprep.subr.mxu0 0.0
        %614 = vmatpush2.msra.mxu0 %v561
        %615 = vmatprep.subr.mxu0 0.0
        %616 = vmatpush2.msra.mxu0 %v560
        %617 = vmatprep.subr.mxu0 0.0
        %618 = vmatpush2.msra.mxu0 %v559
        %619 = vmatprep.subr.mxu0 0.0
        %620 = vmatpush2.msra.mxu0 %v558
        %621 = vmatprep.subr.mxu0 0.0
        %622 = vmatpush2.msra.mxu0 %v557
        %623 = vmatprep.subr.mxu0 0.0
        %624 = vmatpush2.msra.mxu0 %v556
        %625 = vmatprep.subr.mxu0 0.0
        %626 = vmatpush2.msra.mxu0 %v555
        %627 = vmatprep.subr.mxu0 0.0
        %628 = vmatpush2.msra.mxu0 %v554
        %629 = vmatprep.subr.mxu0 0.0
        %630 = vmatpush2.msra.mxu0 %v553
        %631 = vmatprep.subr.mxu0 0.0
        %632 = vmatpush2.msra.mxu0 %v552
        %633 = vmatprep.mubr.f32.mxu0 %v535
        %634 = vmatmul.mubr.f32.gmra.mxu0 %v534
        %v635 = vpop.f32.mrf.mxu0
        %v636 = vadd.f32 %v568, %v635
        %v637 = vpop.f32.mrf.mxu0
        %638 = vdwg.mxu0
        %v639 = vmax.f32 %v636, 0.0
        %v640 = vld [vmem:[%s7] sm:$0xff]
        %v641 = vld [vmem:[%s7 + $0x8] sm:$0xff]
        %v642 = vld [vmem:[%s7 + $0x10] sm:$0xff]
        %v643 = vld [vmem:[%s7 + $0x18] sm:$0xff]
        %v644 = vld [vmem:[%s7 + $0x20] sm:$0xff]
        %v645 = vld [vmem:[%s7 + $0x28] sm:$0xff]
        %v646 = vld [vmem:[%s7 + $0x30] sm:$0xff]
        %v647 = vld [vmem:[%s7 + $0x38] sm:$0xff]
        %v648 = vld [vmem:[%s7 + $0x40] sm:$0xff]
        %v649 = vld [vmem:[%s7 + $0x48] sm:$0xff]
        %v650 = vld [vmem:[%s7 + $0x50] sm:$0xff]
        %v651 = vld [vmem:[%s7 + $0x58] sm:$0xff]
        %v652 = vld [vmem:[%s7 + $0x60] sm:$0xff]
        %v653 = vld [vmem:[%s7 + $0x68] sm:$0xff]
        %v654 = vld [vmem:[%s7 + $0x70] sm:$0xff]
        %v655 = vld [vmem:[%s7 + $0x78] sm:$0xff]
        %v656 = vld [vmem:[%s8] sm:$0x3]
        %v658 = vlaneseq
        %v659 = vshrl.u32 %v658, 7
        %v660 = vsub.s32 0, %v659
        %v661 = vrot.slane %v656, %v660
        %v662 = vlaneseq
        %v663 = vshrl.u32 %v662, 7
        %v664 = vsub.s32 1, %v663
        %v665 = vrot.slane %v656, %v664
        %vm668 = vcmask 523264
        %v670 = vsel %vm668, %v639, 0
        %672 = vmatprep.subr.mxu0 0.0
        %673 = vmatpush1.msra.mxu0 0.0
        %674 = vmatprep.subr.mxu0 0.0
        %675 = vmatpush1.msra.mxu0 0.0
        %676 = vmatprep.subr.mxu0 0.0
        %677 = vmatpush1.msra.mxu0 0.0
        %678 = vmatprep.subr.mxu0 0.0
        %679 = vmatpush1.msra.mxu0 0.0
        %680 = vmatprep.subr.mxu0 0.0
        %681 = vmatpush1.msra.mxu0 0.0
        %682 = vmatprep.subr.mxu0 0.0
        %683 = vmatpush1.msra.mxu0 0.0
        %684 = vmatprep.subr.mxu0 0.0
        %685 = vmatpush1.msra.mxu0 0.0
        %686 = vmatprep.subr.mxu0 0.0
        %687 = vmatpush1.msra.mxu0 0.0
        %688 = vmatprep.subr.mxu0 %v655
        %689 = vmatpush1.msra.mxu0 %v654
        %690 = vmatprep.subr.mxu0 %v653
        %691 = vmatpush1.msra.mxu0 %v652
        %692 = vmatprep.subr.mxu0 %v651
        %693 = vmatpush1.msra.mxu0 %v650
        %694 = vmatprep.subr.mxu0 %v649
        %695 = vmatpush1.msra.mxu0 %v648
        %696 = vmatprep.subr.mxu0 %v647
        %697 = vmatpush1.msra.mxu0 %v646
        %698 = vmatprep.subr.mxu0 %v645
        %699 = vmatpush1.msra.mxu0 %v644
        %700 = vmatprep.subr.mxu0 %v643
        %701 = vmatpush1.msra.mxu0 %v642
        %702 = vmatprep.subr.mxu0 %v641
        %703 = vmatpush1.msra.mxu0 %v640
        %704 = vmatprep.subr.mxu0 0.0
        %705 = vmatpush2.msra.mxu0 0.0
        %706 = vmatprep.subr.mxu0 0.0
        %707 = vmatpush2.msra.mxu0 0.0
        %708 = vmatprep.subr.mxu0 0.0
        %709 = vmatpush2.msra.mxu0 0.0
        %710 = vmatprep.subr.mxu0 0.0
        %711 = vmatpush2.msra.mxu0 0.0
        %712 = vmatprep.subr.mxu0 0.0
        %713 = vmatpush2.msra.mxu0 0.0
        %714 = vmatprep.subr.mxu0 0.0
        %715 = vmatpush2.msra.mxu0 0.0
        %716 = vmatprep.subr.mxu0 0.0
        %717 = vmatpush2.msra.mxu0 0.0
        %718 = vmatprep.subr.mxu0 0.0
        %719 = vmatpush2.msra.mxu0 0.0
        %720 = vmatprep.subr.mxu0 0.0
        %721 = vmatpush2.msra.mxu0 0.0
        %722 = vmatprep.subr.mxu0 0.0
        %723 = vmatpush2.msra.mxu0 0.0
        %724 = vmatprep.subr.mxu0 0.0
        %725 = vmatpush2.msra.mxu0 0.0
        %726 = vmatprep.subr.mxu0 0.0
        %727 = vmatpush2.msra.mxu0 0.0
        %728 = vmatprep.subr.mxu0 0.0
        %729 = vmatpush2.msra.mxu0 0.0
        %730 = vmatprep.subr.mxu0 0.0
        %731 = vmatpush2.msra.mxu0 0.0
        %732 = vmatprep.subr.mxu0 0.0
        %733 = vmatpush2.msra.mxu0 0.0
        %734 = vmatprep.subr.mxu0 0.0
        %735 = vmatpush2.msra.mxu0 0.0
        %736 = vmatprep.mubr.f32.mxu0 0.0
        %737 = vmatmul.mubr.f32.gmra.mxu0 %v670
        %v738 = vpop.f32.mrf.mxu0
        %v739 = vadd.f32 %v661, %v738
        %v740 = vpop.f32.mrf.mxu0
        %v741 = vadd.f32 %v665, %v740
        %742 = vdwg.mxu0
        %v743 = vadd.f32 %v739, 3.0
        %v744 = vadd.f32 %v741, 3.0
        %v745 = vmax.f32 %v743, 0.0
        %v746 = vmax.f32 %v744, 0.0
        %v747 = vmin.f32 %v745, 6.0
        %v748 = vmin.f32 %v746, 6.0
        %v749 = vmul.f32 %v747, 0.16666667
        %v750 = vmul.f32 %v748, 0.16666667
        %v751 = vsub.f32 %v749, 0.5
        %v752 = vsub.f32 %v750, 0.5
        %v753 = vadd.f32 %v751, 1.0
        %v754 = vadd.f32 %v752, 1.0
        %v755 = vlaneseq
        %v756 = vshrl.u32 %v755, 7
        %v757 = vsub.s32 0, %v756
        %v758 = vrot.slane %v753, %v757
        %v759 = vlaneseq
        %v760 = vshrl.u32 %v759, 7
        %v761 = vsub.s32 0, %v760
        %v762 = vrot.slane %v754, %v761
        %v763 = vmul.f32 %v349, %v758
        %v764 = vmul.f32 %v350, %v762
        %v765 = vlaneseq
        %v766 = vshrl.u32 %v765, 7
        %v767 = vsub.s32 0, %v766
        %v768 = vrot.slane %v521, %v767
        %770 = vbcast.lane.b32.xlu0 %v768, 256
        %v771 = vpop.permute.xlu0 %770
        %v772 = vmul.f32 %v763, %v771
        %v773 = vmul.f32 %v764, %v771
        %774 = vst [vmem:[%s348] sm:$0xff] %v772
        %775 = vst [vmem:[%s348 + $0x8] sm:$0xff] %v773
        %s776 = sand.u32 %s228, 1
        %s777 = scalar_lea.sflag [#allocation4], %s776
        %s778 = sand.u32 %s228, 1
        %s779 = smul.addr %s778, 16
        %s780 = scalar_lea.vmem [#allocation5], %s779
        // Predicated region
        $region61: #{tpu_custom_call.1} parent=55 // pred_check
          %p781 = pneg %p238
        $region62: #{tpu_custom_call.1} parent=55 // pred_check_branch
          %783 = sbr.rel (%p781) target = $region64
        $region63: #{tpu_custom_call.1} parent=55 // pred_region
          %s785 = ssub.s32 256, 256
          %786 = vsyncadd %s777, %s785
          %s787 = smul.addr %s26, 2
          %s788 = smul.addr %s787, 128
          %s789 = scalar_lea.hbm %s9, %s788
          %s791 = sshll.u32 %s780, 4
          %s792 = int_to_ptr.vmem [resolvable:$true] %s791
          %794 = dma.vmem_to_hbm [thread:$0]  %s792, 256, %s789, %s777
        $region64: #{tpu_custom_call.1} parent=55 // pred_fallthru
          _
      $region56: #{tpu_custom_call.1} parent=5 // pred_fallthru
        _
      %p795 = scmp.le.s32.totalorder 2, %s21
      // Predicated region
      $region65: #{tpu_custom_call.1} parent=5 // pred_check
        %p796 = pneg %p795
      $region66: #{tpu_custom_call.1} parent=5 // pred_check_branch
        %798 = sbr.rel (%p796) target = $region68
      $region67: #{tpu_custom_call.1} parent=5 // pred_region
        %s799 = ssub.s32 %s21, 2
        // Predicated region
        $region69: #{tpu_custom_call.1} parent=67 // pred_check
          %p800 = pneg %p244
        $region70: #{tpu_custom_call.1} parent=67 // pred_check_branch
          %802 = sbr.rel (%p800) target = $region72
        $region71: #{tpu_custom_call.1} parent=67 // pred_region
          %s803 = sand.u32 %s229, 1
          %s804 = scalar_lea.sflag [#allocation4], %s803
          %s805 = sand.u32 %s229, 1
          %s806 = smul.addr %s805, 16
          %s807 = scalar_lea.vmem [#allocation5], %s806
          %808 = dma.done %s804, 256
        $region72: #{tpu_custom_call.1} parent=67 // pred_fallthru
          _
      $region68: #{tpu_custom_call.1} parent=5 // pred_fallthru
        _
    $region6: #{tpu_custom_call.1} parent=1 // loop_footer
      %s25 = sadd.s32 1, %s21
    $region7: #{tpu_custom_call.1} parent=1 // loop_footer_branch
      %20 = sbr.rel target = $region3
    $region8: #{tpu_custom_call.1} parent=1 // loop_exit
      _
    %809 = vsyncpa [#allocation3], 1
    %s810 = scalar_lea.sflag [#allocation3], 1
    %811 = vsyncpa %s810, 1
    %812 = vsyncpa [#allocation4], 1
    %s813 = scalar_lea.sflag [#allocation4], 1
    %814 = vsyncpa %s813, 1

</llo_original>
